<compile_context>
chip_gen: v5e
topology: v5e:2x2
jax: 0.10.0
libtpu: 0.0.40
codegen_flags: <defaults>
</compile_context>

<pallas_src>
import functools

import jax
import jax.numpy as jnp
from jax import lax
from jax.experimental import pallas as pl
from jax.experimental.pallas import tpu as pltpu


def _round_up(x, m):
    return ((x + m - 1) // m) * m


def rnn_fused_kernel(ids_ref, emb_ref, w_hh_ref, w_out_ref, b_out_ref,
                     out_ref, xp_ref, *, T, B, B_pad):
    """Whole forward pass in a single grid step.

    x_proj[t, b] = emb_proj[ids[b, t]]                (gather; W_ih pre-folded)
    h_t          = tanh(x_proj[t] + h_{t-1} @ W_hh^T)
    out          = h_T @ W_lin^T + b_lin

    Everything stays in f32: the kernel is latency/dispatch bound, so the tiny
    (8,128)@(128,128) MXU hops are not worth compounding bf16 rounding through
    the recurrence.
    """
    # 1) Zero the staging buffer (keeps padded batch rows exactly zero), then
    #    gather the projected-embedding row for every (t, b).  ids live in
    #    SMEM (scalar prefetch); emb_proj is fully VMEM resident (~0.4 MB), so
    #    the gather is T*B cheap dynamically-indexed (1, DH) VMEM loads.
    xp_ref[...] = jnp.zeros_like(xp_ref)
    for t in range(T):
        for b in range(B):
            tok = ids_ref[b, t]                           # scalar read, SMEM
            xp_ref[pl.ds(t * B_pad + b, 1), :] = emb_ref[tok]       # (1, DH)

    xp = xp_ref[...]                                      # (T*B_pad, DH) f32
    w_hh = w_hh_ref[...]                                  # hoisted constant load
    DH = w_hh.shape[0]

    # 2) Serial tanh recurrence, unrolled at trace time (T small & static).
    #    (Pinning W_hh in MXU weight regs via pltpu.matmul_push_rhs/acc_lhs/pop
    #    would shave the per-step weight push; jnp.dot kept for robustness.)
    h = jnp.zeros((B_pad, DH), jnp.float32)
    for t in range(T):
        h = jnp.tanh(xp[t * B_pad:(t + 1) * B_pad, :]
                     + jnp.dot(h, w_hh, preferred_element_type=jnp.float32))

    # 3) Final linear on the last hidden state (lane-dense (B_pad, 128) store).
    out_ref[...] = (jnp.dot(h, w_out_ref[...],
                            preferred_element_type=jnp.float32)
                    + b_out_ref[...])


def prepare_params(params, n_cls=4):
    """One-time parameter prep -- runs once, NOT in the per-call path.

    * Folds W_ih and (b_ih + b_hh) into the embedding table:
        emb_proj = emb @ W_ih^T + bias          (n_vocab, dh)
      gather-then-project == project-then-gather, so this is exact; it removes
      ~86% of per-call FLOPs and the dw=300 -> 384 padding entirely.
    * Transposes / zero-pads W_hh and the output linear to (128, 128) tiles.
      Zero padding is numerically inert: padded hidden lanes of emb_proj and
      padded W_hh columns are zero, so padded lanes of h stay exactly 0
      (tanh(0)=0), and padded W_out rows/cols contribute 0 to the logits.
    """
    emb, w_ih, w_hh, w_lin = (params["emb"], params["w_ih"],
                              params["w_hh"], params["w_lin"])
    bias = params["b_ih"] + params["b_hh"]
    b_lin = params["b_lin"]

    n_vocab = emb.shape[0]
    dh = w_ih.shape[0]
    DH = _round_up(dh, 128)
    NC = _round_up(n_cls, 128)

    hp = lax.Precision.HIGHEST
    emb_proj = jnp.dot(emb, w_ih.T, precision=hp) + bias          # (n_vocab, dh)
    emb_proj = jnp.pad(emb_proj, ((0, 0), (0, DH - dh)))          # pad lanes = 0
    emb_proj = emb_proj.reshape(n_vocab, 1, DH).astype(jnp.float32)

    return {
        "emb_proj": emb_proj,
        "w_hh": jnp.pad(w_hh.T, ((0, DH - dh), (0, DH - dh))).astype(jnp.float32),
        "w_out": jnp.pad(w_lin.T,
                         ((0, DH - dh), (0, NC - n_cls))).astype(jnp.float32),
        "b_out": jnp.pad(b_lin, (0, NC - n_cls)).reshape(1, NC).astype(jnp.float32),
    }


@functools.partial(jax.jit, static_argnames=("n_cls",))
def rnn_forward(x_ids, prep, n_cls=4):
    """Equivalent of RNN.forward(x): emb -> nn.RNN(tanh, batch_first) -> linear(last)."""
    emb_proj, w_hh, w_out, b_out = (prep["emb_proj"], prep["w_hh"],
                                    prep["w_out"], prep["b_out"])
    B, T = x_ids.shape
    n_vocab, _, DH = emb_proj.shape
    NC = w_out.shape[1]
    B_pad = _round_up(max(B, 8), 8)          # >= 8 sublanes of batch rows

    kernel = functools.partial(rnn_fused_kernel, T=T, B=B, B_pad=B_pad)
    out = pl.pallas_call(
        kernel,
        out_shape=jax.ShapeDtypeStruct((B_pad, NC), jnp.float32),
        grid_spec=pltpu.PrefetchScalarGridSpec(
            num_scalar_prefetch=1,           # x_ids -> SMEM before the grid
            grid=(1,),
            in_specs=[
                pl.BlockSpec((n_vocab, 1, DH), lambda i, ids: (0, 0, 0)),
                pl.BlockSpec((DH, DH), lambda i, ids: (0, 0)),
                pl.BlockSpec((DH, NC), lambda i, ids: (0, 0)),
                pl.BlockSpec((1, NC), lambda i, ids: (0, 0)),
            ],
            out_specs=pl.BlockSpec((B_pad, NC), lambda i, ids: (0, 0)),
            scratch_shapes=[pltpu.VMEM((T * B_pad, DH), jnp.float32)],
        ),
        compiler_params=pltpu.CompilerParams(
            dimension_semantics=("arbitrary",)),
    )(x_ids, emb_proj, w_hh, w_out, b_out)
    return out[:B, :n_cls]


def make_params(key, n_vocab, pad_idx, dw, dh, n_cls=4):
    ks = jax.random.split(key, 7)
    scale = 0.1
    emb = scale * jax.random.normal(ks[0], (n_vocab, dw), jnp.float32)
    emb = emb.at[pad_idx].set(0.0)                            # padding_idx row = 0
    return {
        "emb": emb,
        "w_ih": scale * jax.random.normal(ks[1], (dh, dw), jnp.float32),
        "w_hh": scale * jax.random.normal(ks[2], (dh, dh), jnp.float32),
        "b_ih": scale * jax.random.normal(ks[3], (dh,), jnp.float32),
        "b_hh": scale * jax.random.normal(ks[4], (dh,), jnp.float32),
        "w_lin": scale * jax.random.normal(ks[5], (n_cls, dh), jnp.float32),
        "b_lin": scale * jax.random.normal(ks[6], (n_cls,), jnp.float32),
    }


def reference_forward(x_ids, params):
    """Pure-JAX f32 reference mirroring torch semantics (HIGHEST-precision dots)."""
    hp = lax.Precision.HIGHEST
    x = jnp.take(params["emb"], x_ids, axis=0)                # (B, T, dw)
    B, T, _ = x.shape
    dh = params["w_ih"].shape[0]
    h = jnp.zeros((B, dh), jnp.float32)
    for t in range(T):
        h = jnp.tanh(jnp.dot(x[:, t, :], params["w_ih"].T, precision=hp)
                     + params["b_ih"]
                     + jnp.dot(h, params["w_hh"].T, precision=hp)
                     + params["b_hh"])
    return jnp.dot(h, params["w_lin"].T, precision=hp) + params["b_lin"]


if __name__ == "__main__":
    # small, deterministic shapes consistent with the module's forward:
    B, T = 2, 8
    dw, dh = 300, 50            # module's dw/dh
    n_vocab = 101               # small synthetic vocab; PAD = n_vocab - 1
    PAD = n_vocab - 1

    key = jax.random.PRNGKey(0)
    k_ids, k_params = jax.random.split(key)
    x_ids = jax.random.randint(k_ids, (B, T), 0, n_vocab, dtype=jnp.int32)
    x_ids = x_ids.at[:, -2:].set(PAD)                         # some padding tokens

    params = make_params(k_params, n_vocab, PAD, dw, dh)
    prep = prepare_params(params)                             # one-time weight prep
    jax.block_until_ready(prep["emb_proj"])

    out = rnn_forward(x_ids, prep, n_cls=4)
    jax.block_until_ready(out)

    ref = reference_forward(x_ids, params)
    assert out.shape == (B, 4)
    # Kernel keeps f32 end-to-end (W_ih fold done at HIGHEST precision); 1e-2
    # tolerance leaves a very comfortable margin over default MXU f32 passes.
    assert jnp.allclose(out, ref, atol=1e-2, rtol=1e-2), (out, ref)

    print("KERNEL_OK")
</pallas_src>

<mosaic_0001>
module attributes {stable_mosaic.version = 11 : i64} {
  func.func @rnn_fused_kernel(%arg0: i32, %arg1: memref<2x8xi32, #tpu.memory_space<smem>>, %arg2: memref<101x1x128xf32, #tpu.memory_space<vmem>>, %arg3: memref<128x128xf32, #tpu.memory_space<vmem>>, %arg4: memref<128x128xf32, #tpu.memory_space<vmem>>, %arg5: memref<1x128xf32, #tpu.memory_space<vmem>>, %arg6: memref<8x128xf32, #tpu.memory_space<vmem>>, %arg7: memref<64x128xf32, #tpu.memory_space<vmem>>) attributes {dimension_semantics = [#tpu.dimension_semantics<arbitrary>], iteration_bounds = array<i64: 1>, scalar_prefetch = 1 : i64, scratch_operands = 1 : i64, tpu.core_type = #tpu.core_type<tc>, window_params = [{pipeline_mode = #tpu.pipeline_mode<synchronous>, transform_indices = @transform_0, window_bounds = array<i64: 101, 1, 128>}, {pipeline_mode = #tpu.pipeline_mode<synchronous>, transform_indices = @transform_1, window_bounds = array<i64: 128, 128>}, {pipeline_mode = #tpu.pipeline_mode<synchronous>, transform_indices = @transform_2, window_bounds = array<i64: 128, 128>}, {pipeline_mode = #tpu.pipeline_mode<synchronous>, transform_indices = @transform_3, window_bounds = array<i64: 1, 128>}, {pipeline_mode = #tpu.pipeline_mode<synchronous>, transform_indices = @transform_4, window_bounds = array<i64: 8, 128>}]} {
    %cst = arith.constant 0.000000e+00 : f32
    %0 = vector.broadcast %cst : f32 to vector<64x128xf32>
    %c0 = arith.constant 0 : index
    %c0_0 = arith.constant 0 : index
    %1 = vector.load %arg7[%c0, %c0_0] : memref<64x128xf32, #tpu.memory_space<vmem>>, vector<64x128xf32>
    tpu.vector_store %arg7[%c0, %c0_0], %0 {strides = array<i32>} : memref<64x128xf32, #tpu.memory_space<vmem>>, vector<64x128xf32>,
    %c0_1 = arith.constant 0 : index
    %c0_2 = arith.constant 0 : index
    %2 = memref.load %arg1[%c0_1, %c0_2] : memref<2x8xi32, #tpu.memory_space<smem>>
    %3 = arith.index_cast %2 : i32 to index
    %c0_3 = arith.constant 0 : index
    %c0_4 = arith.constant 0 : index
    %4 = vector.load %arg2[%3, %c0_3, %c0_4] : memref<101x1x128xf32, #tpu.memory_space<vmem>>, vector<1x1x128xf32>
    %5 = vector.shape_cast %4 : vector<1x1x128xf32> to vector<1x128xf32>
    %c0_5 = arith.constant 0 : index
    %c0_6 = arith.constant 0 : index
    %6 = vector.load %arg7[%c0_5, %c0_6] : memref<64x128xf32, #tpu.memory_space<vmem>>, vector<1x128xf32>
    tpu.vector_store %arg7[%c0_5, %c0_6], %5 {strides = array<i32>} : memref<64x128xf32, #tpu.memory_space<vmem>>, vector<1x128xf32>,
    %c1 = arith.constant 1 : index
    %c0_7 = arith.constant 0 : index
    %7 = memref.load %arg1[%c1, %c0_7] : memref<2x8xi32, #tpu.memory_space<smem>>
    %8 = arith.index_cast %7 : i32 to index
    %c0_8 = arith.constant 0 : index
    %c0_9 = arith.constant 0 : index
    %9 = vector.load %arg2[%8, %c0_8, %c0_9] : memref<101x1x128xf32, #tpu.memory_space<vmem>>, vector<1x1x128xf32>
    %10 = vector.shape_cast %9 : vector<1x1x128xf32> to vector<1x128xf32>
    %c1_10 = arith.constant 1 : index
    %c0_11 = arith.constant 0 : index
    %11 = vector.load %arg7[%c1_10, %c0_11] : memref<64x128xf32, #tpu.memory_space<vmem>>, vector<1x128xf32>
    tpu.vector_store %arg7[%c1_10, %c0_11], %10 {strides = array<i32>} : memref<64x128xf32, #tpu.memory_space<vmem>>, vector<1x128xf32>,
    %c0_12 = arith.constant 0 : index
    %c1_13 = arith.constant 1 : index
    %12 = memref.load %arg1[%c0_12, %c1_13] : memref<2x8xi32, #tpu.memory_space<smem>>
    %13 = arith.index_cast %12 : i32 to index
    %c0_14 = arith.constant 0 : index
    %c0_15 = arith.constant 0 : index
    %14 = vector.load %arg2[%13, %c0_14, %c0_15] : memref<101x1x128xf32, #tpu.memory_space<vmem>>, vector<1x1x128xf32>
    %15 = vector.shape_cast %14 : vector<1x1x128xf32> to vector<1x128xf32>
    %c8 = arith.constant 8 : index
    %c0_16 = arith.constant 0 : index
    %16 = vector.load %arg7[%c8, %c0_16] : memref<64x128xf32, #tpu.memory_space<vmem>>, vector<1x128xf32>
    tpu.vector_store %arg7[%c8, %c0_16], %15 {strides = array<i32>} : memref<64x128xf32, #tpu.memory_space<vmem>>, vector<1x128xf32>,
    %c1_17 = arith.constant 1 : index
    %c1_18 = arith.constant 1 : index
    %17 = memref.load %arg1[%c1_17, %c1_18] : memref<2x8xi32, #tpu.memory_space<smem>>
    %18 = arith.index_cast %17 : i32 to index
    %c0_19 = arith.constant 0 : index
    %c0_20 = arith.constant 0 : index
    %19 = vector.load %arg2[%18, %c0_19, %c0_20] : memref<101x1x128xf32, #tpu.memory_space<vmem>>, vector<1x1x128xf32>
    %20 = vector.shape_cast %19 : vector<1x1x128xf32> to vector<1x128xf32>
    %c9 = arith.constant 9 : index
    %c0_21 = arith.constant 0 : index
    %21 = vector.load %arg7[%c9, %c0_21] : memref<64x128xf32, #tpu.memory_space<vmem>>, vector<1x128xf32>
    tpu.vector_store %arg7[%c9, %c0_21], %20 {strides = array<i32>} : memref<64x128xf32, #tpu.memory_space<vmem>>, vector<1x128xf32>,
    %c0_22 = arith.constant 0 : index
    %c2 = arith.constant 2 : index
    %22 = memref.load %arg1[%c0_22, %c2] : memref<2x8xi32, #tpu.memory_space<smem>>
    %23 = arith.index_cast %22 : i32 to index
    %c0_23 = arith.constant 0 : index
    %c0_24 = arith.constant 0 : index
    %24 = vector.load %arg2[%23, %c0_23, %c0_24] : memref<101x1x128xf32, #tpu.memory_space<vmem>>, vector<1x1x128xf32>
    %25 = vector.shape_cast %24 : vector<1x1x128xf32> to vector<1x128xf32>
    %c16 = arith.constant 16 : index
    %c0_25 = arith.constant 0 : index
    %26 = vector.load %arg7[%c16, %c0_25] : memref<64x128xf32, #tpu.memory_space<vmem>>, vector<1x128xf32>
    tpu.vector_store %arg7[%c16, %c0_25], %25 {strides = array<i32>} : memref<64x128xf32, #tpu.memory_space<vmem>>, vector<1x128xf32>,
    %c1_26 = arith.constant 1 : index
    %c2_27 = arith.constant 2 : index
    %27 = memref.load %arg1[%c1_26, %c2_27] : memref<2x8xi32, #tpu.memory_space<smem>>
    %28 = arith.index_cast %27 : i32 to index
    %c0_28 = arith.constant 0 : index
    %c0_29 = arith.constant 0 : index
    %29 = vector.load %arg2[%28, %c0_28, %c0_29] : memref<101x1x128xf32, #tpu.memory_space<vmem>>, vector<1x1x128xf32>
    %30 = vector.shape_cast %29 : vector<1x1x128xf32> to vector<1x128xf32>
    %c17 = arith.constant 17 : index
    %c0_30 = arith.constant 0 : index
    %31 = vector.load %arg7[%c17, %c0_30] : memref<64x128xf32, #tpu.memory_space<vmem>>, vector<1x128xf32>
    tpu.vector_store %arg7[%c17, %c0_30], %30 {strides = array<i32>} : memref<64x128xf32, #tpu.memory_space<vmem>>, vector<1x128xf32>,
    %c0_31 = arith.constant 0 : index
    %c3 = arith.constant 3 : index
    %32 = memref.load %arg1[%c0_31, %c3] : memref<2x8xi32, #tpu.memory_space<smem>>
    %33 = arith.index_cast %32 : i32 to index
    %c0_32 = arith.constant 0 : index
    %c0_33 = arith.constant 0 : index
    %34 = vector.load %arg2[%33, %c0_32, %c0_33] : memref<101x1x128xf32, #tpu.memory_space<vmem>>, vector<1x1x128xf32>
    %35 = vector.shape_cast %34 : vector<1x1x128xf32> to vector<1x128xf32>
    %c24 = arith.constant 24 : index
    %c0_34 = arith.constant 0 : index
    %36 = vector.load %arg7[%c24, %c0_34] : memref<64x128xf32, #tpu.memory_space<vmem>>, vector<1x128xf32>
    tpu.vector_store %arg7[%c24, %c0_34], %35 {strides = array<i32>} : memref<64x128xf32, #tpu.memory_space<vmem>>, vector<1x128xf32>,
    %c1_35 = arith.constant 1 : index
    %c3_36 = arith.constant 3 : index
    %37 = memref.load %arg1[%c1_35, %c3_36] : memref<2x8xi32, #tpu.memory_space<smem>>
    %38 = arith.index_cast %37 : i32 to index
    %c0_37 = arith.constant 0 : index
    %c0_38 = arith.constant 0 : index
    %39 = vector.load %arg2[%38, %c0_37, %c0_38] : memref<101x1x128xf32, #tpu.memory_space<vmem>>, vector<1x1x128xf32>
    %40 = vector.shape_cast %39 : vector<1x1x128xf32> to vector<1x128xf32>
    %c25 = arith.constant 25 : index
    %c0_39 = arith.constant 0 : index
    %41 = vector.load %arg7[%c25, %c0_39] : memref<64x128xf32, #tpu.memory_space<vmem>>, vector<1x128xf32>
    tpu.vector_store %arg7[%c25, %c0_39], %40 {strides = array<i32>} : memref<64x128xf32, #tpu.memory_space<vmem>>, vector<1x128xf32>,
    %c0_40 = arith.constant 0 : index
    %c4 = arith.constant 4 : index
    %42 = memref.load %arg1[%c0_40, %c4] : memref<2x8xi32, #tpu.memory_space<smem>>
    %43 = arith.index_cast %42 : i32 to index
    %c0_41 = arith.constant 0 : index
    %c0_42 = arith.constant 0 : index
    %44 = vector.load %arg2[%43, %c0_41, %c0_42] : memref<101x1x128xf32, #tpu.memory_space<vmem>>, vector<1x1x128xf32>
    %45 = vector.shape_cast %44 : vector<1x1x128xf32> to vector<1x128xf32>
    %c32 = arith.constant 32 : index
    %c0_43 = arith.constant 0 : index
    %46 = vector.load %arg7[%c32, %c0_43] : memref<64x128xf32, #tpu.memory_space<vmem>>, vector<1x128xf32>
    tpu.vector_store %arg7[%c32, %c0_43], %45 {strides = array<i32>} : memref<64x128xf32, #tpu.memory_space<vmem>>, vector<1x128xf32>,
    %c1_44 = arith.constant 1 : index
    %c4_45 = arith.constant 4 : index
    %47 = memref.load %arg1[%c1_44, %c4_45] : memref<2x8xi32, #tpu.memory_space<smem>>
    %48 = arith.index_cast %47 : i32 to index
    %c0_46 = arith.constant 0 : index
    %c0_47 = arith.constant 0 : index
    %49 = vector.load %arg2[%48, %c0_46, %c0_47] : memref<101x1x128xf32, #tpu.memory_space<vmem>>, vector<1x1x128xf32>
    %50 = vector.shape_cast %49 : vector<1x1x128xf32> to vector<1x128xf32>
    %c33 = arith.constant 33 : index
    %c0_48 = arith.constant 0 : index
    %51 = vector.load %arg7[%c33, %c0_48] : memref<64x128xf32, #tpu.memory_space<vmem>>, vector<1x128xf32>
    tpu.vector_store %arg7[%c33, %c0_48], %50 {strides = array<i32>} : memref<64x128xf32, #tpu.memory_space<vmem>>, vector<1x128xf32>,
    %c0_49 = arith.constant 0 : index
    %c5 = arith.constant 5 : index
    %52 = memref.load %arg1[%c0_49, %c5] : memref<2x8xi32, #tpu.memory_space<smem>>
    %53 = arith.index_cast %52 : i32 to index
    %c0_50 = arith.constant 0 : index
    %c0_51 = arith.constant 0 : index
    %54 = vector.load %arg2[%53, %c0_50, %c0_51] : memref<101x1x128xf32, #tpu.memory_space<vmem>>, vector<1x1x128xf32>
    %55 = vector.shape_cast %54 : vector<1x1x128xf32> to vector<1x128xf32>
    %c40 = arith.constant 40 : index
    %c0_52 = arith.constant 0 : index
    %56 = vector.load %arg7[%c40, %c0_52] : memref<64x128xf32, #tpu.memory_space<vmem>>, vector<1x128xf32>
    tpu.vector_store %arg7[%c40, %c0_52], %55 {strides = array<i32>} : memref<64x128xf32, #tpu.memory_space<vmem>>, vector<1x128xf32>,
    %c1_53 = arith.constant 1 : index
    %c5_54 = arith.constant 5 : index
    %57 = memref.load %arg1[%c1_53, %c5_54] : memref<2x8xi32, #tpu.memory_space<smem>>
    %58 = arith.index_cast %57 : i32 to index
    %c0_55 = arith.constant 0 : index
    %c0_56 = arith.constant 0 : index
    %59 = vector.load %arg2[%58, %c0_55, %c0_56] : memref<101x1x128xf32, #tpu.memory_space<vmem>>, vector<1x1x128xf32>
    %60 = vector.shape_cast %59 : vector<1x1x128xf32> to vector<1x128xf32>
    %c41 = arith.constant 41 : index
    %c0_57 = arith.constant 0 : index
    %61 = vector.load %arg7[%c41, %c0_57] : memref<64x128xf32, #tpu.memory_space<vmem>>, vector<1x128xf32>
    tpu.vector_store %arg7[%c41, %c0_57], %60 {strides = array<i32>} : memref<64x128xf32, #tpu.memory_space<vmem>>, vector<1x128xf32>,
    %c0_58 = arith.constant 0 : index
    %c6 = arith.constant 6 : index
    %62 = memref.load %arg1[%c0_58, %c6] : memref<2x8xi32, #tpu.memory_space<smem>>
    %63 = arith.index_cast %62 : i32 to index
    %c0_59 = arith.constant 0 : index
    %c0_60 = arith.constant 0 : index
    %64 = vector.load %arg2[%63, %c0_59, %c0_60] : memref<101x1x128xf32, #tpu.memory_space<vmem>>, vector<1x1x128xf32>
    %65 = vector.shape_cast %64 : vector<1x1x128xf32> to vector<1x128xf32>
    %c48 = arith.constant 48 : index
    %c0_61 = arith.constant 0 : index
    %66 = vector.load %arg7[%c48, %c0_61] : memref<64x128xf32, #tpu.memory_space<vmem>>, vector<1x128xf32>
    tpu.vector_store %arg7[%c48, %c0_61], %65 {strides = array<i32>} : memref<64x128xf32, #tpu.memory_space<vmem>>, vector<1x128xf32>,
    %c1_62 = arith.constant 1 : index
    %c6_63 = arith.constant 6 : index
    %67 = memref.load %arg1[%c1_62, %c6_63] : memref<2x8xi32, #tpu.memory_space<smem>>
    %68 = arith.index_cast %67 : i32 to index
    %c0_64 = arith.constant 0 : index
    %c0_65 = arith.constant 0 : index
    %69 = vector.load %arg2[%68, %c0_64, %c0_65] : memref<101x1x128xf32, #tpu.memory_space<vmem>>, vector<1x1x128xf32>
    %70 = vector.shape_cast %69 : vector<1x1x128xf32> to vector<1x128xf32>
    %c49 = arith.constant 49 : index
    %c0_66 = arith.constant 0 : index
    %71 = vector.load %arg7[%c49, %c0_66] : memref<64x128xf32, #tpu.memory_space<vmem>>, vector<1x128xf32>
    tpu.vector_store %arg7[%c49, %c0_66], %70 {strides = array<i32>} : memref<64x128xf32, #tpu.memory_space<vmem>>, vector<1x128xf32>,
    %c0_67 = arith.constant 0 : index
    %c7 = arith.constant 7 : index
    %72 = memref.load %arg1[%c0_67, %c7] : memref<2x8xi32, #tpu.memory_space<smem>>
    %73 = arith.index_cast %72 : i32 to index
    %c0_68 = arith.constant 0 : index
    %c0_69 = arith.constant 0 : index
    %74 = vector.load %arg2[%73, %c0_68, %c0_69] : memref<101x1x128xf32, #tpu.memory_space<vmem>>, vector<1x1x128xf32>
    %75 = vector.shape_cast %74 : vector<1x1x128xf32> to vector<1x128xf32>
    %c56 = arith.constant 56 : index
    %c0_70 = arith.constant 0 : index
    %76 = vector.load %arg7[%c56, %c0_70] : memref<64x128xf32, #tpu.memory_space<vmem>>, vector<1x128xf32>
    tpu.vector_store %arg7[%c56, %c0_70], %75 {strides = array<i32>} : memref<64x128xf32, #tpu.memory_space<vmem>>, vector<1x128xf32>,
    %c1_71 = arith.constant 1 : index
    %c7_72 = arith.constant 7 : index
    %77 = memref.load %arg1[%c1_71, %c7_72] : memref<2x8xi32, #tpu.memory_space<smem>>
    %78 = arith.index_cast %77 : i32 to index
    %c0_73 = arith.constant 0 : index
    %c0_74 = arith.constant 0 : index
    %79 = vector.load %arg2[%78, %c0_73, %c0_74] : memref<101x1x128xf32, #tpu.memory_space<vmem>>, vector<1x1x128xf32>
    %80 = vector.shape_cast %79 : vector<1x1x128xf32> to vector<1x128xf32>
    %c57 = arith.constant 57 : index
    %c0_75 = arith.constant 0 : index
    %81 = vector.load %arg7[%c57, %c0_75] : memref<64x128xf32, #tpu.memory_space<vmem>>, vector<1x128xf32>
    tpu.vector_store %arg7[%c57, %c0_75], %80 {strides = array<i32>} : memref<64x128xf32, #tpu.memory_space<vmem>>, vector<1x128xf32>,
    %c0_76 = arith.constant 0 : index
    %c0_77 = arith.constant 0 : index
    %82 = vector.load %arg7[%c0_76, %c0_77] : memref<64x128xf32, #tpu.memory_space<vmem>>, vector<64x128xf32>
    %c0_78 = arith.constant 0 : index
    %c0_79 = arith.constant 0 : index
    %83 = vector.load %arg3[%c0_78, %c0_79] : memref<128x128xf32, #tpu.memory_space<vmem>>, vector<128x128xf32>
    %cst_80 = arith.constant 0.000000e+00 : f32
    %84 = vector.broadcast %cst_80 : f32 to vector<8x128xf32>
    %85 = vector.extract_strided_slice %82 {offsets = [0, 0], sizes = [8, 128], strides = [1, 1]} : vector<64x128xf32> to vector<8x128xf32>
    %cst_81 = arith.constant dense<0.000000e+00> : vector<8x128xf32>
    %86 = tpu.matmul %84, %83, %cst_81 {dimension_numbers = #tpu.dot_dimension_numbers<[1], [0], [0], [1], [0, 0, 1, 1], [], []>} : vector<8x128xf32>, vector<128x128xf32>, vector<8x128xf32> -> vector<8x128xf32>
    %87 = arith.addf %85, %86 : vector<8x128xf32>
    %88 = math.tanh %87 : vector<8x128xf32>
    %89 = vector.extract_strided_slice %82 {offsets = [8, 0], sizes = [8, 128], strides = [1, 1]} : vector<64x128xf32> to vector<8x128xf32>
    %cst_82 = arith.constant dense<0.000000e+00> : vector<8x128xf32>
    %90 = tpu.matmul %88, %83, %cst_82 {dimension_numbers = #tpu.dot_dimension_numbers<[1], [0], [0], [1], [0, 0, 1, 1], [], []>} : vector<8x128xf32>, vector<128x128xf32>, vector<8x128xf32> -> vector<8x128xf32>
    %91 = arith.addf %89, %90 : vector<8x128xf32>
    %92 = math.tanh %91 : vector<8x128xf32>
    %93 = vector.extract_strided_slice %82 {offsets = [16, 0], sizes = [8, 128], strides = [1, 1]} : vector<64x128xf32> to vector<8x128xf32>
    %cst_83 = arith.constant dense<0.000000e+00> : vector<8x128xf32>
    %94 = tpu.matmul %92, %83, %cst_83 {dimension_numbers = #tpu.dot_dimension_numbers<[1], [0], [0], [1], [0, 0, 1, 1], [], []>} : vector<8x128xf32>, vector<128x128xf32>, vector<8x128xf32> -> vector<8x128xf32>
    %95 = arith.addf %93, %94 : vector<8x128xf32>
    %96 = math.tanh %95 : vector<8x128xf32>
    %97 = vector.extract_strided_slice %82 {offsets = [24, 0], sizes = [8, 128], strides = [1, 1]} : vector<64x128xf32> to vector<8x128xf32>
    %cst_84 = arith.constant dense<0.000000e+00> : vector<8x128xf32>
    %98 = tpu.matmul %96, %83, %cst_84 {dimension_numbers = #tpu.dot_dimension_numbers<[1], [0], [0], [1], [0, 0, 1, 1], [], []>} : vector<8x128xf32>, vector<128x128xf32>, vector<8x128xf32> -> vector<8x128xf32>
    %99 = arith.addf %97, %98 : vector<8x128xf32>
    %100 = math.tanh %99 : vector<8x128xf32>
    %101 = vector.extract_strided_slice %82 {offsets = [32, 0], sizes = [8, 128], strides = [1, 1]} : vector<64x128xf32> to vector<8x128xf32>
    %cst_85 = arith.constant dense<0.000000e+00> : vector<8x128xf32>
    %102 = tpu.matmul %100, %83, %cst_85 {dimension_numbers = #tpu.dot_dimension_numbers<[1], [0], [0], [1], [0, 0, 1, 1], [], []>} : vector<8x128xf32>, vector<128x128xf32>, vector<8x128xf32> -> vector<8x128xf32>
    %103 = arith.addf %101, %102 : vector<8x128xf32>
    %104 = math.tanh %103 : vector<8x128xf32>
    %105 = vector.extract_strided_slice %82 {offsets = [40, 0], sizes = [8, 128], strides = [1, 1]} : vector<64x128xf32> to vector<8x128xf32>
    %cst_86 = arith.constant dense<0.000000e+00> : vector<8x128xf32>
    %106 = tpu.matmul %104, %83, %cst_86 {dimension_numbers = #tpu.dot_dimension_numbers<[1], [0], [0], [1], [0, 0, 1, 1], [], []>} : vector<8x128xf32>, vector<128x128xf32>, vector<8x128xf32> -> vector<8x128xf32>
    %107 = arith.addf %105, %106 : vector<8x128xf32>
    %108 = math.tanh %107 : vector<8x128xf32>
    %109 = vector.extract_strided_slice %82 {offsets = [48, 0], sizes = [8, 128], strides = [1, 1]} : vector<64x128xf32> to vector<8x128xf32>
    %cst_87 = arith.constant dense<0.000000e+00> : vector<8x128xf32>
    %110 = tpu.matmul %108, %83, %cst_87 {dimension_numbers = #tpu.dot_dimension_numbers<[1], [0], [0], [1], [0, 0, 1, 1], [], []>} : vector<8x128xf32>, vector<128x128xf32>, vector<8x128xf32> -> vector<8x128xf32>
    %111 = arith.addf %109, %110 : vector<8x128xf32>
    %112 = math.tanh %111 : vector<8x128xf32>
    %113 = vector.extract_strided_slice %82 {offsets = [56, 0], sizes = [8, 128], strides = [1, 1]} : vector<64x128xf32> to vector<8x128xf32>
    %cst_88 = arith.constant dense<0.000000e+00> : vector<8x128xf32>
    %114 = tpu.matmul %112, %83, %cst_88 {dimension_numbers = #tpu.dot_dimension_numbers<[1], [0], [0], [1], [0, 0, 1, 1], [], []>} : vector<8x128xf32>, vector<128x128xf32>, vector<8x128xf32> -> vector<8x128xf32>
    %115 = arith.addf %113, %114 : vector<8x128xf32>
    %116 = math.tanh %115 : vector<8x128xf32>
    %c0_89 = arith.constant 0 : index
    %c0_90 = arith.constant 0 : index
    %117 = vector.load %arg4[%c0_89, %c0_90] : memref<128x128xf32, #tpu.memory_space<vmem>>, vector<128x128xf32>
    %cst_91 = arith.constant dense<0.000000e+00> : vector<8x128xf32>
    %118 = tpu.matmul %116, %117, %cst_91 {dimension_numbers = #tpu.dot_dimension_numbers<[1], [0], [0], [1], [0, 0, 1, 1], [], []>} : vector<8x128xf32>, vector<128x128xf32>, vector<8x128xf32> -> vector<8x128xf32>
    %c0_92 = arith.constant 0 : index
    %c0_93 = arith.constant 0 : index
    %119 = vector.load %arg5[%c0_92, %c0_93] : memref<1x128xf32, #tpu.memory_space<vmem>>, vector<1x128xf32>
    %120 = vector.broadcast %119 : vector<1x128xf32> to vector<8x128xf32>
    %121 = arith.addf %118, %120 : vector<8x128xf32>
    %c0_94 = arith.constant 0 : index
    %c0_95 = arith.constant 0 : index
    %122 = vector.load %arg6[%c0_94, %c0_95] : memref<8x128xf32, #tpu.memory_space<vmem>>, vector<8x128xf32>
    tpu.vector_store %arg6[%c0_94, %c0_95], %121 {strides = array<i32>} : memref<8x128xf32, #tpu.memory_space<vmem>>, vector<8x128xf32>,
    return
  }
  func.func @transform_0(%arg0: i32, %arg1: memref<2x8xi32, #tpu.memory_space<smem>>) -> (i32, i32, i32) {
    %c0_i32 = arith.constant 0 : i32
    %c0_i32_0 = arith.constant 0 : i32
    %c0_i32_1 = arith.constant 0 : i32
    %c0_i32_2 = arith.constant 0 : i32
    return %c0_i32, %c0_i32_0, %c0_i32_1 : i32, i32, i32
  }
  func.func @transform_1(%arg0: i32, %arg1: memref<2x8xi32, #tpu.memory_space<smem>>) -> (i32, i32) {
    %c0_i32 = arith.constant 0 : i32
    %c0_i32_0 = arith.constant 0 : i32
    %c0_i32_1 = arith.constant 0 : i32
    return %c0_i32, %c0_i32_0 : i32, i32
  }
  func.func @transform_2(%arg0: i32, %arg1: memref<2x8xi32, #tpu.memory_space<smem>>) -> (i32, i32) {
    %c0_i32 = arith.constant 0 : i32
    %c0_i32_0 = arith.constant 0 : i32
    %c0_i32_1 = arith.constant 0 : i32
    return %c0_i32, %c0_i32_0 : i32, i32
  }
  func.func @transform_3(%arg0: i32, %arg1: memref<2x8xi32, #tpu.memory_space<smem>>) -> (i32, i32) {
    %c0_i32 = arith.constant 0 : i32
    %c0_i32_0 = arith.constant 0 : i32
    %c0_i32_1 = arith.constant 0 : i32
    return %c0_i32, %c0_i32_0 : i32, i32
  }
  func.func @transform_4(%arg0: i32, %arg1: memref<2x8xi32, #tpu.memory_space<smem>>) -> (i32, i32) {
    %c0_i32 = arith.constant 0 : i32
    %c0_i32_0 = arith.constant 0 : i32
    %c0_i32_1 = arith.constant 0 : i32
    return %c0_i32, %c0_i32_0 : i32, i32
  }
}

</mosaic_0001>

<llo_original>
// kernel: rnn_forward.1
$region0: #{rnn_forward.1}
  #allocation0 [shape = 'u32[]', space=smem, size = 0x4, offset = 0x4, fixed_abs, tag = 'smem constant byte address 0x4 - core index']
  #allocation1 [shape = 'u32[72,128]{1,0:T(1,128)}', space=vmem, size = 0x9000, scoped, tag = 'internal scratch']
  #allocation2 [shape = 'f32[64,128]{1,0:T(8,128)}', space=vmem, size = 0x8000, scoped, tag = 'scratch operand']
  #allocation3 [shape = 's32[1]{0}', space=sflag, size = 0x4, scoped, tag = 'scoped memory for rnn_forward.1']
  #allocation4 [shape = 'u8[1024]{0}', space=smem, size = 0x400, scoped, tag = 'prefetched SMEM operand 0']
  %s0 = inlined_call_operand.hbm [shape: s32[2,8], index: 0, kind: input, shape index: {}]
  %s1 = inlined_call_operand.hbm [shape: f32[101,1,128], index: 1, kind: input, shape index: {}]
  %s2 = inlined_call_operand.hbm [shape: f32[128,128], index: 2, kind: input, shape index: {}]
  %s3 = inlined_call_operand.hbm [shape: f32[128,128], index: 3, kind: input, shape index: {}]
  %s4 = inlined_call_operand.hbm [shape: f32[1,128], index: 4, kind: input, shape index: {}]
  %s5 = inlined_call_operand.vmem [shape: f32[8,128], index: 5, kind: output, shape index: {}]
  %s6 = sld [smem:[#allocation0]]
  $region42: #{rnn_forward.1} parent=0
    _
  %s8 = ssub.s32 1, %s6
  %s9 = scalar_select 0, %s8, %s6
  %s11 = sshll.u32 %s0, 4
  %s12 = int_to_ptr.hbm [resolvable:$true] %s11
  %14 = dma.hbm_to_smem %s12, 32, [#allocation4], [#allocation3]
  %16 = dma.done [#allocation3], 32
  %17 = sfence
  $region1: #{rnn_forward.1} parent=0
    #allocation5 [shape = 'u8[51712]{0}', space=vmem, size = 0xcc00, scoped, tag = 'input window, operand 1, single buffered']
    #allocation6 [shape = 's32[1]{0}', space=sflag, size = 0x4, scoped, tag = 'scoped memory for rnn_forward.1']
    #allocation7 [shape = 'u8[65536]{0}', space=vmem, size = 0x10000, scoped, tag = 'input window, operand 2, single buffered']
    #allocation8 [shape = 's32[1]{0}', space=sflag, size = 0x4, scoped, tag = 'scoped memory for rnn_forward.1']
    #allocation9 [shape = 'u8[65536]{0}', space=vmem, size = 0x10000, scoped, tag = 'input window, operand 3, single buffered']
    #allocation10 [shape = 'u8[512]{0}', space=vmem, size = 0x400, scoped, tag = 'input window, operand 4, single buffered']
    #allocation11 [shape = 's32[1]{0}', space=sflag, size = 0x4, scoped, tag = 'scoped memory for rnn_forward.1']
    %18 = vsyncpa [#allocation6], 0
    %19 = vsyncpa [#allocation8], 0
    %20 = vsyncpa [#allocation11], 0
    // Predicated region
    $region2: #{rnn_forward.1} parent=1 // pred_check
      _
    $region3: #{rnn_forward.1} parent=1 // pred_check_branch
      %22 = sbr.rel (0) target = $region5
    $region4: #{rnn_forward.1} parent=1 // pred_region
      %24 = vsyncadd [#allocation6], 0
      %s25 = sshll.u32 %s1, 4
      %s26 = int_to_ptr.hbm [resolvable:$true] %s25
      %s27 = sshll.u32 [#allocation5], 4
      %s28 = int_to_ptr.vmem [resolvable:$true] %s27
      %33 = dma.hbm_to_vmem [thread:$0]  %s26, 1616, %s28, [#allocation6], 16, 16, 1
    $region5: #{rnn_forward.1} parent=1 // pred_fallthru
      _
    // Predicated region
    $region6: #{rnn_forward.1} parent=1 // pred_check
      _
    $region7: #{rnn_forward.1} parent=1 // pred_check_branch
      %35 = sbr.rel (0) target = $region9
    $region8: #{rnn_forward.1} parent=1 // pred_region
      %37 = vsyncadd [#allocation8], 0
      %s38 = sshll.u32 %s2, 4
      %s39 = int_to_ptr.hbm [resolvable:$true] %s38
      %s40 = sshll.u32 [#allocation7], 4
      %s41 = int_to_ptr.vmem [resolvable:$true] %s40
      %46 = dma.hbm_to_vmem [thread:$0]  %s39, 2048, %s41, [#allocation8], 128, 128, 8
    $region9: #{rnn_forward.1} parent=1 // pred_fallthru
      _
    // Predicated region
    $region10: #{rnn_forward.1} parent=1 // pred_check
      _
    $region11: #{rnn_forward.1} parent=1 // pred_check_branch
      %48 = sbr.rel (0) target = $region13
    $region12: #{rnn_forward.1} parent=1 // pred_region
      %50 = vsyncadd [#allocation8], 0
      %s51 = sshll.u32 %s3, 4
      %s52 = int_to_ptr.hbm [resolvable:$true] %s51
      %s53 = sshll.u32 [#allocation9], 4
      %s54 = int_to_ptr.vmem [resolvable:$true] %s53
      %59 = dma.hbm_to_vmem [thread:$0]  %s52, 2048, %s54, [#allocation8], 128, 128, 8
    $region13: #{rnn_forward.1} parent=1 // pred_fallthru
      _
    // Predicated region
    $region14: #{rnn_forward.1} parent=1 // pred_check
      _
    $region15: #{rnn_forward.1} parent=1 // pred_check_branch
      %61 = sbr.rel (0) target = $region17
    $region16: #{rnn_forward.1} parent=1 // pred_region
      %63 = vsyncadd [#allocation11], 0
      %s65 = sshll.u32 %s4, 4
      %s66 = int_to_ptr.hbm [resolvable:$true] %s65
      %s67 = sshll.u32 [#allocation10], 4
      %s68 = int_to_ptr.vmem [resolvable:$true] %s67
      %70 = dma.hbm_to_vmem [thread:$0]  %s66, 16, %s68, [#allocation11]
    $region17: #{rnn_forward.1} parent=1 // pred_fallthru
      _
    // Predicated region
    $region18: #{rnn_forward.1} parent=1 // pred_check
      _
    $region19: #{rnn_forward.1} parent=1 // pred_check_branch
      %72 = sbr.rel (0) target = $region21
    $region20: #{rnn_forward.1} parent=1 // pred_region
      %74 = dma.done [#allocation6], 1616
    $region21: #{rnn_forward.1} parent=1 // pred_fallthru
      _
    // Predicated region
    $region22: #{rnn_forward.1} parent=1 // pred_check
      _
    $region23: #{rnn_forward.1} parent=1 // pred_check_branch
      %76 = sbr.rel (0) target = $region25
    $region24: #{rnn_forward.1} parent=1 // pred_region
      %78 = dma.done [#allocation8], 2048
    $region25: #{rnn_forward.1} parent=1 // pred_fallthru
      _
    // Predicated region
    $region26: #{rnn_forward.1} parent=1 // pred_check
      _
    $region27: #{rnn_forward.1} parent=1 // pred_check_branch
      %80 = sbr.rel (0) target = $region29
    $region28: #{rnn_forward.1} parent=1 // pred_region
      %82 = dma.done [#allocation8], 2048
    $region29: #{rnn_forward.1} parent=1 // pred_fallthru
      _
    // Predicated region
    $region30: #{rnn_forward.1} parent=1 // pred_check
      _
    $region31: #{rnn_forward.1} parent=1 // pred_check_branch
      %84 = sbr.rel (0) target = $region33
    $region32: #{rnn_forward.1} parent=1 // pred_region
      %86 = dma.done [#allocation11], 16
    $region33: #{rnn_forward.1} parent=1 // pred_fallthru
      _
    %87 = vst [vmem:[#allocation2] sm:$0xff] 0.0
    %88 = vst [vmem:[#allocation2 + $0x8] sm:$0xff] 0.0
    %89 = vst [vmem:[#allocation2 + $0x10] sm:$0xff] 0.0
    %90 = vst [vmem:[#allocation2 + $0x18] sm:$0xff] 0.0
    %91 = vst [vmem:[#allocation2 + $0x20] sm:$0xff] 0.0
    %92 = vst [vmem:[#allocation2 + $0x28] sm:$0xff] 0.0
    %93 = vst [vmem:[#allocation2 + $0x30] sm:$0xff] 0.0
    %94 = vst [vmem:[#allocation2 + $0x38] sm:$0xff] 0.0
    %s95 = sld [smem:[#allocation4]]
    %s96 = scalar_lea.vmem [#allocation5], %s95
    %v97 = vld [vmem:[%s96] sm:$0x1]
    %98 = vst [vmem:[#allocation2] sm:$0x1] %v97
    %s99 = sld [smem:[#allocation4 + $0x80]]
    %s100 = scalar_lea.vmem [#allocation5], %s99
    %v101 = vld [vmem:[%s100] sm:$0x1]
    %102 = vst [vmem:[#allocation2 + $0x1] sm:$0x1] %v101
    %s103 = sld [smem:[#allocation4 + $0x1]]
    %s104 = scalar_lea.vmem [#allocation5], %s103
    %v105 = vld [vmem:[%s104] sm:$0x1]
    %106 = vst [vmem:[#allocation2 + $0x8] sm:$0x1] %v105
    %s107 = sld [smem:[#allocation4 + $0x81]]
    %s108 = scalar_lea.vmem [#allocation5], %s107
    %v109 = vld [vmem:[%s108] sm:$0x1]
    %110 = vst [vmem:[#allocation2 + $0x9] sm:$0x1] %v109
    %s111 = sld [smem:[#allocation4 + $0x2]]
    %s112 = scalar_lea.vmem [#allocation5], %s111
    %v113 = vld [vmem:[%s112] sm:$0x1]
    %114 = vst [vmem:[#allocation2 + $0x10] sm:$0x1] %v113
    %s115 = sld [smem:[#allocation4 + $0x82]]
    %s116 = scalar_lea.vmem [#allocation5], %s115
    %v117 = vld [vmem:[%s116] sm:$0x1]
    %118 = vst [vmem:[#allocation2 + $0x11] sm:$0x1] %v117
    %s119 = sld [smem:[#allocation4 + $0x3]]
    %s120 = scalar_lea.vmem [#allocation5], %s119
    %v121 = vld [vmem:[%s120] sm:$0x1]
    %122 = vst [vmem:[#allocation2 + $0x18] sm:$0x1] %v121
    %s123 = sld [smem:[#allocation4 + $0x83]]
    %s124 = scalar_lea.vmem [#allocation5], %s123
    %v125 = vld [vmem:[%s124] sm:$0x1]
    %126 = vst [vmem:[#allocation2 + $0x19] sm:$0x1] %v125
    %s127 = sld [smem:[#allocation4 + $0x4]]
    %s128 = scalar_lea.vmem [#allocation5], %s127
    %v129 = vld [vmem:[%s128] sm:$0x1]
    %130 = vst [vmem:[#allocation2 + $0x20] sm:$0x1] %v129
    %s131 = sld [smem:[#allocation4 + $0x84]]
    %s132 = scalar_lea.vmem [#allocation5], %s131
    %v133 = vld [vmem:[%s132] sm:$0x1]
    %134 = vst [vmem:[#allocation2 + $0x21] sm:$0x1] %v133
    %s135 = sld [smem:[#allocation4 + $0x5]]
    %s136 = scalar_lea.vmem [#allocation5], %s135
    %v137 = vld [vmem:[%s136] sm:$0x1]
    %138 = vst [vmem:[#allocation2 + $0x28] sm:$0x1] %v137
    %s139 = sld [smem:[#allocation4 + $0x85]]
    %s140 = scalar_lea.vmem [#allocation5], %s139
    %v141 = vld [vmem:[%s140] sm:$0x1]
    %142 = vst [vmem:[#allocation2 + $0x29] sm:$0x1] %v141
    %s143 = sld [smem:[#allocation4 + $0x6]]
    %s144 = scalar_lea.vmem [#allocation5], %s143
    %v145 = vld [vmem:[%s144] sm:$0x1]
    %146 = vst [vmem:[#allocation2 + $0x30] sm:$0x1] %v145
    %s147 = sld [smem:[#allocation4 + $0x86]]
    %s148 = scalar_lea.vmem [#allocation5], %s147
    %v149 = vld [vmem:[%s148] sm:$0x1]
    %150 = vst [vmem:[#allocation2 + $0x31] sm:$0x1] %v149
    %s151 = sld [smem:[#allocation4 + $0x7]]
    %s152 = scalar_lea.vmem [#allocation5], %s151
    %v153 = vld [vmem:[%s152] sm:$0x1]
    %154 = vst [vmem:[#allocation2 + $0x38] sm:$0x1] %v153
    %s155 = sld [smem:[#allocation4 + $0x87]]
    %s156 = scalar_lea.vmem [#allocation5], %s155
    %v157 = vld [vmem:[%s156] sm:$0x1]
    %158 = vst [vmem:[#allocation2 + $0x39] sm:$0x1] %v157
    %v159 = vld [vmem:[#allocation2] sm:$0xff]
    %v160 = vld [vmem:[#allocation2 + $0x8] sm:$0xff]
    %v161 = vld [vmem:[#allocation2 + $0x10] sm:$0xff]
    %v162 = vld [vmem:[#allocation2 + $0x18] sm:$0xff]
    %v163 = vld [vmem:[#allocation2 + $0x20] sm:$0xff]
    %v164 = vld [vmem:[#allocation2 + $0x28] sm:$0xff]
    %v165 = vld [vmem:[#allocation2 + $0x30] sm:$0xff]
    %v166 = vld [vmem:[#allocation2 + $0x38] sm:$0xff]
    %v167 = vld [vmem:[#allocation7] sm:$0xff]
    %v168 = vld [vmem:[#allocation7 + $0x8] sm:$0xff]
    %v169 = vld [vmem:[#allocation7 + $0x10] sm:$0xff]
    %v170 = vld [vmem:[#allocation7 + $0x18] sm:$0xff]
    %v171 = vld [vmem:[#allocation7 + $0x20] sm:$0xff]
    %v172 = vld [vmem:[#allocation7 + $0x28] sm:$0xff]
    %v173 = vld [vmem:[#allocation7 + $0x30] sm:$0xff]
    %v174 = vld [vmem:[#allocation7 + $0x38] sm:$0xff]
    %v175 = vld [vmem:[#allocation7 + $0x40] sm:$0xff]
    %v176 = vld [vmem:[#allocation7 + $0x48] sm:$0xff]
    %v177 = vld [vmem:[#allocation7 + $0x50] sm:$0xff]
    %v178 = vld [vmem:[#allocation7 + $0x58] sm:$0xff]
    %v179 = vld [vmem:[#allocation7 + $0x60] sm:$0xff]
    %v180 = vld [vmem:[#allocation7 + $0x68] sm:$0xff]
    %v181 = vld [vmem:[#allocation7 + $0x70] sm:$0xff]
    %v182 = vld [vmem:[#allocation7 + $0x78] sm:$0xff]
    %183 = vmatpush.msra.mxu0 %v182
    %184 = vmatpush.msra.mxu0 %v181
    %185 = vmatpush.msra.mxu0 %v180
    %186 = vmatpush.msra.mxu0 %v179
    %187 = vmatpush.msra.mxu0 %v178
    %188 = vmatpush.msra.mxu0 %v177
    %189 = vmatpush.msra.mxu0 %v176
    %190 = vmatpush.msra.mxu0 %v175
    %191 = vmatpush.msra.mxu0 %v174
    %192 = vmatpush.msra.mxu0 %v173
    %193 = vmatpush.msra.mxu0 %v172
    %194 = vmatpush.msra.mxu0 %v171
    %195 = vmatpush.msra.mxu0 %v170
    %196 = vmatpush.msra.mxu0 %v169
    %197 = vmatpush.msra.mxu0 %v168
    %198 = vmatpush.msra.mxu0 %v167
    %199 = vmatmul.f32.gmra.mxu0 0.0
    %v200 = vpop.f32.mrf.mxu0
    %v201 = vadd.f32 0.0, %v200
    %202 = vdwg.mxu0
    %v203 = vadd.f32 %v159, %v201
    %v204 = vtanh.pop %v203
    %205 = vmatpush.msra.mxu0 %v182
    %206 = vmatpush.msra.mxu0 %v181
    %207 = vmatpush.msra.mxu0 %v180
    %208 = vmatpush.msra.mxu0 %v179
    %209 = vmatpush.msra.mxu0 %v178
    %210 = vmatpush.msra.mxu0 %v177
    %211 = vmatpush.msra.mxu0 %v176
    %212 = vmatpush.msra.mxu0 %v175
    %213 = vmatpush.msra.mxu0 %v174
    %214 = vmatpush.msra.mxu0 %v173
    %215 = vmatpush.msra.mxu0 %v172
    %216 = vmatpush.msra.mxu0 %v171
    %217 = vmatpush.msra.mxu0 %v170
    %218 = vmatpush.msra.mxu0 %v169
    %219 = vmatpush.msra.mxu0 %v168
    %220 = vmatpush.msra.mxu0 %v167
    %221 = vmatmul.f32.gmra.mxu0 %v204
    %v222 = vpop.f32.mrf.mxu0
    %v223 = vadd.f32 0.0, %v222
    %224 = vdwg.mxu0
    %v225 = vadd.f32 %v160, %v223
    %v226 = vtanh.pop %v225
    %227 = vmatpush.msra.mxu0 %v182
    %228 = vmatpush.msra.mxu0 %v181
    %229 = vmatpush.msra.mxu0 %v180
    %230 = vmatpush.msra.mxu0 %v179
    %231 = vmatpush.msra.mxu0 %v178
    %232 = vmatpush.msra.mxu0 %v177
    %233 = vmatpush.msra.mxu0 %v176
    %234 = vmatpush.msra.mxu0 %v175
    %235 = vmatpush.msra.mxu0 %v174
    %236 = vmatpush.msra.mxu0 %v173
    %237 = vmatpush.msra.mxu0 %v172
    %238 = vmatpush.msra.mxu0 %v171
    %239 = vmatpush.msra.mxu0 %v170
    %240 = vmatpush.msra.mxu0 %v169
    %241 = vmatpush.msra.mxu0 %v168
    %242 = vmatpush.msra.mxu0 %v167
    %243 = vmatmul.f32.gmra.mxu0 %v226
    %v244 = vpop.f32.mrf.mxu0
    %v245 = vadd.f32 0.0, %v244
    %246 = vdwg.mxu0
    %v247 = vadd.f32 %v161, %v245
    %v248 = vtanh.pop %v247
    %249 = vmatpush.msra.mxu0 %v182
    %250 = vmatpush.msra.mxu0 %v181
    %251 = vmatpush.msra.mxu0 %v180
    %252 = vmatpush.msra.mxu0 %v179
    %253 = vmatpush.msra.mxu0 %v178
    %254 = vmatpush.msra.mxu0 %v177
    %255 = vmatpush.msra.mxu0 %v176
    %256 = vmatpush.msra.mxu0 %v175
    %257 = vmatpush.msra.mxu0 %v174
    %258 = vmatpush.msra.mxu0 %v173
    %259 = vmatpush.msra.mxu0 %v172
    %260 = vmatpush.msra.mxu0 %v171
    %261 = vmatpush.msra.mxu0 %v170
    %262 = vmatpush.msra.mxu0 %v169
    %263 = vmatpush.msra.mxu0 %v168
    %264 = vmatpush.msra.mxu0 %v167
    %265 = vmatmul.f32.gmra.mxu0 %v248
    %v266 = vpop.f32.mrf.mxu0
    %v267 = vadd.f32 0.0, %v266
    %268 = vdwg.mxu0
    %v269 = vadd.f32 %v162, %v267
    %v270 = vtanh.pop %v269
    %271 = vmatpush.msra.mxu0 %v182
    %272 = vmatpush.msra.mxu0 %v181
    %273 = vmatpush.msra.mxu0 %v180
    %274 = vmatpush.msra.mxu0 %v179
    %275 = vmatpush.msra.mxu0 %v178
    %276 = vmatpush.msra.mxu0 %v177
    %277 = vmatpush.msra.mxu0 %v176
    %278 = vmatpush.msra.mxu0 %v175
    %279 = vmatpush.msra.mxu0 %v174
    %280 = vmatpush.msra.mxu0 %v173
    %281 = vmatpush.msra.mxu0 %v172
    %282 = vmatpush.msra.mxu0 %v171
    %283 = vmatpush.msra.mxu0 %v170
    %284 = vmatpush.msra.mxu0 %v169
    %285 = vmatpush.msra.mxu0 %v168
    %286 = vmatpush.msra.mxu0 %v167
    %287 = vmatmul.f32.gmra.mxu0 %v270
    %v288 = vpop.f32.mrf.mxu0
    %v289 = vadd.f32 0.0, %v288
    %290 = vdwg.mxu0
    %v291 = vadd.f32 %v163, %v289
    %v292 = vtanh.pop %v291
    %293 = vmatpush.msra.mxu0 %v182
    %294 = vmatpush.msra.mxu0 %v181
    %295 = vmatpush.msra.mxu0 %v180
    %296 = vmatpush.msra.mxu0 %v179
    %297 = vmatpush.msra.mxu0 %v178
    %298 = vmatpush.msra.mxu0 %v177
    %299 = vmatpush.msra.mxu0 %v176
    %300 = vmatpush.msra.mxu0 %v175
    %301 = vmatpush.msra.mxu0 %v174
    %302 = vmatpush.msra.mxu0 %v173
    %303 = vmatpush.msra.mxu0 %v172
    %304 = vmatpush.msra.mxu0 %v171
    %305 = vmatpush.msra.mxu0 %v170
    %306 = vmatpush.msra.mxu0 %v169
    %307 = vmatpush.msra.mxu0 %v168
    %308 = vmatpush.msra.mxu0 %v167
    %309 = vmatmul.f32.gmra.mxu0 %v292
    %v310 = vpop.f32.mrf.mxu0
    %v311 = vadd.f32 0.0, %v310
    %312 = vdwg.mxu0
    %v313 = vadd.f32 %v164, %v311
    %v314 = vtanh.pop %v313
    %315 = vmatpush.msra.mxu0 %v182
    %316 = vmatpush.msra.mxu0 %v181
    %317 = vmatpush.msra.mxu0 %v180
    %318 = vmatpush.msra.mxu0 %v179
    %319 = vmatpush.msra.mxu0 %v178
    %320 = vmatpush.msra.mxu0 %v177
    %321 = vmatpush.msra.mxu0 %v176
    %322 = vmatpush.msra.mxu0 %v175
    %323 = vmatpush.msra.mxu0 %v174
    %324 = vmatpush.msra.mxu0 %v173
    %325 = vmatpush.msra.mxu0 %v172
    %326 = vmatpush.msra.mxu0 %v171
    %327 = vmatpush.msra.mxu0 %v170
    %328 = vmatpush.msra.mxu0 %v169
    %329 = vmatpush.msra.mxu0 %v168
    %330 = vmatpush.msra.mxu0 %v167
    %331 = vmatmul.f32.gmra.mxu0 %v314
    %v332 = vpop.f32.mrf.mxu0
    %v333 = vadd.f32 0.0, %v332
    %334 = vdwg.mxu0
    %v335 = vadd.f32 %v165, %v333
    %v336 = vtanh.pop %v335
    %337 = vmatpush.msra.mxu0 %v182
    %338 = vmatpush.msra.mxu0 %v181
    %339 = vmatpush.msra.mxu0 %v180
    %340 = vmatpush.msra.mxu0 %v179
    %341 = vmatpush.msra.mxu0 %v178
    %342 = vmatpush.msra.mxu0 %v177
    %343 = vmatpush.msra.mxu0 %v176
    %344 = vmatpush.msra.mxu0 %v175
    %345 = vmatpush.msra.mxu0 %v174
    %346 = vmatpush.msra.mxu0 %v173
    %347 = vmatpush.msra.mxu0 %v172
    %348 = vmatpush.msra.mxu0 %v171
    %349 = vmatpush.msra.mxu0 %v170
    %350 = vmatpush.msra.mxu0 %v169
    %351 = vmatpush.msra.mxu0 %v168
    %352 = vmatpush.msra.mxu0 %v167
    %353 = vmatmul.f32.gmra.mxu0 %v336
    %v354 = vpop.f32.mrf.mxu0
    %v355 = vadd.f32 0.0, %v354
    %356 = vdwg.mxu0
    %v357 = vadd.f32 %v166, %v355
    %v358 = vtanh.pop %v357
    %v359 = vld [vmem:[#allocation9] sm:$0xff]
    %v360 = vld [vmem:[#allocation9 + $0x8] sm:$0xff]
    %v361 = vld [vmem:[#allocation9 + $0x10] sm:$0xff]
    %v362 = vld [vmem:[#allocation9 + $0x18] sm:$0xff]
    %v363 = vld [vmem:[#allocation9 + $0x20] sm:$0xff]
    %v364 = vld [vmem:[#allocation9 + $0x28] sm:$0xff]
    %v365 = vld [vmem:[#allocation9 + $0x30] sm:$0xff]
    %v366 = vld [vmem:[#allocation9 + $0x38] sm:$0xff]
    %v367 = vld [vmem:[#allocation9 + $0x40] sm:$0xff]
    %v368 = vld [vmem:[#allocation9 + $0x48] sm:$0xff]
    %v369 = vld [vmem:[#allocation9 + $0x50] sm:$0xff]
    %v370 = vld [vmem:[#allocation9 + $0x58] sm:$0xff]
    %v371 = vld [vmem:[#allocation9 + $0x60] sm:$0xff]
    %v372 = vld [vmem:[#allocation9 + $0x68] sm:$0xff]
    %v373 = vld [vmem:[#allocation9 + $0x70] sm:$0xff]
    %v374 = vld [vmem:[#allocation9 + $0x78] sm:$0xff]
    %v375 = vld [vmem:[#allocation10] sm:$0x1]
    %v377 = vperm.slane %v375, 0
    %379 = vmatpush.msra.mxu0 %v374
    %380 = vmatpush.msra.mxu0 %v373
    %381 = vmatpush.msra.mxu0 %v372
    %382 = vmatpush.msra.mxu0 %v371
    %383 = vmatpush.msra.mxu0 %v370
    %384 = vmatpush.msra.mxu0 %v369
    %385 = vmatpush.msra.mxu0 %v368
    %386 = vmatpush.msra.mxu0 %v367
    %387 = vmatpush.msra.mxu0 %v366
    %388 = vmatpush.msra.mxu0 %v365
    %389 = vmatpush.msra.mxu0 %v364
    %390 = vmatpush.msra.mxu0 %v363
    %391 = vmatpush.msra.mxu0 %v362
    %392 = vmatpush.msra.mxu0 %v361
    %393 = vmatpush.msra.mxu0 %v360
    %394 = vmatpush.msra.mxu0 %v359
    %395 = vmatmul.f32.gmra.mxu0 %v358
    %v396 = vpop.f32.mrf.mxu0
    %v397 = vadd.f32 %v377, %v396
    %398 = vdwg.mxu0
    %399 = vst [vmem:[%s5] sm:$0xff] %v397
    // Predicated region
    $region34: #{rnn_forward.1} parent=1 // pred_check
      _
    $region35: #{rnn_forward.1} parent=1 // pred_check_branch
      %401 = sbr.rel (0) target = $region37
    $region36: #{rnn_forward.1} parent=1 // pred_region
      _
    $region37: #{rnn_forward.1} parent=1 // pred_fallthru
      _
    // Predicated region
    $region38: #{rnn_forward.1} parent=1 // pred_check
      _
    $region39: #{rnn_forward.1} parent=1 // pred_check_branch
      %403 = sbr.rel (0) target = $region41
    $region40: #{rnn_forward.1} parent=1 // pred_region
      _
    $region41: #{rnn_forward.1} parent=1 // pred_fallthru
      _
    %404 = vsyncpa [#allocation6], 1
    %405 = vsyncpa [#allocation8], 1
    %406 = vsyncpa [#allocation11], 1

</llo_original>
